<compile_context>
chip_gen: v6e
topology: v6e:2x2x1
jax: 0.10.0
libtpu: 0.0.40
codegen_flags: <defaults>
</compile_context>

<pallas_src>
import functools
import math

import jax
import jax.numpy as jnp
from jax.experimental import pallas as pl
from jax.experimental.pallas import tpu as pltpu

_LANES = 128


def _wmse_partials_kernel(yt_ref, yp_ref, t_ref, neg_ref, tot_ref, *,
                          block_rows, total_rows, need_row_mask):
    """One (sample-group, row-chunk) block -> per-sample lane-wise partial sums.

    yt_ref / yp_ref : (S, R, 128) input blocks in their native dtype.
    t_ref / neg_ref / tot_ref : (S, 128) f32 partial sums (row per sample).
    The cross-chunk / cross-lane combination is a few KB and is done in JAX.
    """
    yt = yt_ref[...].astype(jnp.float32)
    yp = yp_ref[...].astype(jnp.float32)

    if need_row_mask:
        # Last row-chunk may extend past the real rows; those VMEM rows hold
        # unspecified data, so zero them (zeros contribute 0 to all sums).
        j = pl.program_id(1)
        valid_rows = total_rows - j * block_rows
        row_ids = jax.lax.broadcasted_iota(jnp.int32, yt.shape, dimension=1)
        keep = row_ids < valid_rows
        yt = jnp.where(keep, yt, 0.0)
        yp = jnp.where(keep, yp, 0.0)

    d = yp - yt
    d2 = d * d                      # == yp**2 wherever yt == 0
    is_zero = yt == 0.0

    temp_y = jnp.where(yt > 0.5, 1.0, 0.0)
    neg = jnp.where(is_zero, d2, 0.0)

    # Sum over the row axis only (pure VPU adds, stays lane dense).
    t_ref[...] = temp_y.sum(axis=1)
    neg_ref[...] = neg.sum(axis=1)
    tot_ref[...] = d2.sum(axis=1)


def weighted_mse(y_true, y_pred, b_mult=1.0):
    """Pallas implementation of WeightedMSE.forward. Returns a scalar f32.

    y_true, y_pred: (N, C, H, W) arrays, same shape. Inputs stream in their
    native dtype (bf16 y_pred is fine; keep y_true in its original dtype so
    the ==0 / >0.5 comparisons match the reference). b_mult is unused in the
    original forward (kept for signature parity).
    """
    del b_mult
    assert y_true.shape == y_pred.shape and y_true.ndim >= 2
    n = y_true.shape[0]
    k = math.prod(y_true.shape[1:])

    yt = y_true.reshape(n, k)
    yp = y_pred.reshape(n, k)

    if k % _LANES != 0:
        # Rare case (C*H*W not a multiple of 128): pad lanes with zeros, which
        # contribute 0 to every partial sum; divisors below use the true k.
        pad = (-k) % _LANES
        yt = jnp.pad(yt, ((0, 0), (0, pad)))
        yp = jnp.pad(yp, ((0, 0), (0, pad)))
    rows = (k + _LANES - 1) // _LANES

    yt = yt.reshape(n, rows, _LANES)
    yp = yp.reshape(n, rows, _LANES)

    # ---- generation-aware VMEM budget -------------------------------------
    try:
        vmem_cap = int(pltpu.get_tpu_info().vmem_capacity_bytes)
    except Exception:  # pragma: no cover - conservative fallback (v7x-safe)
        vmem_cap = 64 * 1024 * 1024
    vmem_limit = min((vmem_cap * 3) // 4, 96 * 1024 * 1024)
    # Two inputs, double-buffered -> 4 live input blocks; leave ~2 MiB slack.
    per_block_budget = max(1 << 20, min(8 << 20, (vmem_limit - (2 << 20)) // 4))

    elt = max(jnp.dtype(y_true.dtype).itemsize, jnp.dtype(y_pred.dtype).itemsize)
    sample_bytes = rows * _LANES * elt

    if sample_bytes <= per_block_budget:
        # Small samples: pack several samples per block so DMAs stay large.
        s = max(1, min(n, per_block_budget // max(sample_bytes, 1)))
        if n % s != 0:
            divisors = [d for d in range(1, s + 1) if n % d == 0]
            best = max(divisors)
            if 2 * best >= s:        # prefer an even split when it is cheap
                s = best
        r = rows                     # full extent -> no row raggedness
        num_chunks = 1
        need_row_mask = False
    else:
        # Large samples: one sample per block, chunk the row axis.
        s = 1
        r = max(8, (per_block_budget // (_LANES * elt)) // 8 * 8)
        r = min(r, ((rows + 7) // 8) * 8)
        num_chunks = -(-rows // r)
        need_row_mask = (num_chunks * r != rows)

    n_groups = -(-n // s)
    grid = (n_groups, num_chunks)

    kernel = functools.partial(
        _wmse_partials_kernel,
        block_rows=r, total_rows=rows, need_row_mask=need_row_mask)

    part_shape = jax.ShapeDtypeStruct((n_groups, num_chunks, s, _LANES),
                                      jnp.float32)
    part_spec = pl.BlockSpec((None, None, s, _LANES),
                             lambda g, j: (g, j, 0, 0))
    in_spec = pl.BlockSpec((s, r, _LANES), lambda g, j: (g, j, 0))

    bytes_in = n * rows * _LANES * (jnp.dtype(y_true.dtype).itemsize
                                    + jnp.dtype(y_pred.dtype).itemsize)
    bytes_out = 3 * n_groups * num_chunks * s * _LANES * 4
    cost = pl.CostEstimate(flops=10 * n * rows * _LANES, transcendentals=0,
                           bytes_accessed=bytes_in + bytes_out)

    out_t, out_neg, out_tot = pl.pallas_call(
        kernel,
        out_shape=(part_shape, part_shape, part_shape),
        grid_spec=pltpu.PrefetchScalarGridSpec(
            num_scalar_prefetch=0,
            grid=grid,
            in_specs=[in_spec, in_spec],
            out_specs=[part_spec, part_spec, part_spec],
        ),
        compiler_params=pltpu.CompilerParams(
            dimension_semantics=("parallel", "parallel"),
            vmem_limit_bytes=vmem_limit,
        ),
        cost_estimate=cost,
    )(yt, yp)

    def per_sample(partials):
        # (n_groups, num_chunks, s, 128) -> (n,); drop any phantom samples of
        # the last (ragged) sample group before combining across the batch.
        return partials.sum(axis=(1, 3)).reshape(-1)[:n]

    inv_k = 1.0 / k
    sum_t = per_sample(out_t)
    sum_neg = per_sample(out_neg)
    sum_tot = per_sample(out_tot)

    mean_t = sum_t * inv_k
    m_neg = sum_neg * inv_k
    m_pos = (sum_tot - sum_neg) * inv_k      # (yp - yt)^2 restricted to yt != 0
    m = (1.0 - mean_t) * m_pos + mean_t * m_neg
    return jnp.mean(m)


def _reference(y_true, y_pred):
    """Pure-JAX reference mirroring the PyTorch forward."""
    y_true = y_true.astype(jnp.float32)
    y_pred = y_pred.astype(jnp.float32)
    temp_y = jnp.where(y_true > 0.5, 1.0, 0.0)
    mean_t = jnp.mean(temp_y, axis=(1, 2, 3))
    zero_idx = jnp.where(y_true == 0.0, 1.0, 0.0)
    non_zero_idx = jnp.where(y_true != 0.0, 1.0, 0.0)
    m_neg = jnp.mean(y_pred ** 2 * zero_idx, axis=(1, 2, 3))
    m_pos = jnp.mean((y_pred - y_true) ** 2 * non_zero_idx, axis=(1, 2, 3))
    m = (1.0 - mean_t) * m_pos + mean_t * m_neg
    return jnp.mean(m, axis=-1)


if __name__ == "__main__":
    key = jax.random.PRNGKey(0)
    k1, k2 = jax.random.split(key)
    N, C, H, W = 2, 4, 16, 16

    # y_true: edge-map-like target with exact zeros (so zero_idx is non-trivial)
    u = jax.random.uniform(k1, (N, C, H, W), dtype=jnp.float32)
    y_true = jnp.where(u > 0.6, u, 0.0)
    y_pred = jax.random.uniform(k2, (N, C, H, W), dtype=jnp.float32)

    out = weighted_mse(y_true, y_pred)
    out = jax.block_until_ready(out)

    ref = _reference(y_true, y_pred)
    assert jnp.allclose(out, ref, atol=1e-5, rtol=1e-5), (out, ref)
    print("KERNEL_OK")
</pallas_src>

<mosaic_0001>
module attributes {stable_mosaic.version = 11 : i64} {
  func.func @_wmse_partials_kernel(%arg0: i32, %arg1: i32, %arg2: memref<2x8x128xf32, #tpu.memory_space<vmem>>, %arg3: memref<2x8x128xf32, #tpu.memory_space<vmem>>, %arg4: memref<1x1x2x128xf32, #tpu.memory_space<vmem>>, %arg5: memref<1x1x2x128xf32, #tpu.memory_space<vmem>>, %arg6: memref<1x1x2x128xf32, #tpu.memory_space<vmem>>) attributes {dimension_semantics = [#tpu.dimension_semantics<parallel>, #tpu.dimension_semantics<parallel>], iteration_bounds = array<i64: 1, 1>, scalar_prefetch = 0 : i64, scratch_operands = 0 : i64, tpu.core_type = #tpu.core_type<tc>, window_params = [{transform_indices = @transform_0, window_bounds = array<i64: 2, 8, 128>}, {transform_indices = @transform_1, window_bounds = array<i64: 2, 8, 128>}, {transform_indices = @transform_2, window_bounds = array<i64: 1, 1, 2, 128>}, {transform_indices = @transform_3, window_bounds = array<i64: 1, 1, 2, 128>}, {transform_indices = @transform_4, window_bounds = array<i64: 1, 1, 2, 128>}]} {
    %c0 = arith.constant 0 : index
    %c0_0 = arith.constant 0 : index
    %c0_1 = arith.constant 0 : index
    %0 = vector.load %arg2[%c0, %c0_0, %c0_1] : memref<2x8x128xf32, #tpu.memory_space<vmem>>, vector<2x8x128xf32>
    %c0_2 = arith.constant 0 : index
    %c0_3 = arith.constant 0 : index
    %c0_4 = arith.constant 0 : index
    %1 = vector.load %arg3[%c0_2, %c0_3, %c0_4] : memref<2x8x128xf32, #tpu.memory_space<vmem>>, vector<2x8x128xf32>
    %2 = arith.subf %1, %0 : vector<2x8x128xf32>
    %3 = arith.mulf %2, %2 : vector<2x8x128xf32>
    %cst = arith.constant 0.000000e+00 : f32
    %4 = vector.broadcast %cst : f32 to vector<2x8x128xf32>
    %5 = arith.cmpf oeq, %0, %4 : vector<2x8x128xf32>
    %cst_5 = arith.constant 5.000000e-01 : f32
    %6 = vector.broadcast %cst_5 : f32 to vector<2x8x128xf32>
    %7 = arith.cmpf ogt, %0, %6 : vector<2x8x128xf32>
    %cst_6 = arith.constant 1.000000e+00 : f32
    %cst_7 = arith.constant 0.000000e+00 : f32
    %8 = vector.broadcast %cst_6 : f32 to vector<2x8x128xf32>
    %9 = vector.broadcast %cst_7 : f32 to vector<2x8x128xf32>
    %10 = arith.select %7, %8, %9 : vector<2x8x128xi1>, vector<2x8x128xf32>
    %cst_8 = arith.constant 0.000000e+00 : f32
    %11 = vector.broadcast %cst_8 : f32 to vector<2x8x128xf32>
    %12 = arith.select %5, %3, %11 : vector<2x8x128xi1>, vector<2x8x128xf32>
    %cst_9 = arith.constant dense<0.000000e+00> : vector<2x128xf32>
    %13 = vector.multi_reduction <add>, %10, %cst_9 [1] : vector<2x8x128xf32> to vector<2x128xf32>
    %c0_10 = arith.constant 0 : index
    %c0_11 = arith.constant 0 : index
    %c0_12 = arith.constant 0 : index
    %c0_13 = arith.constant 0 : index
    %14 = vector.load %arg4[%c0_10, %c0_11, %c0_12, %c0_13] : memref<1x1x2x128xf32, #tpu.memory_space<vmem>>, vector<1x1x2x128xf32>
    %15 = vector.shape_cast %14 : vector<1x1x2x128xf32> to vector<2x128xf32>
    %16 = vector.shape_cast %13 : vector<2x128xf32> to vector<1x1x2x128xf32>
    tpu.vector_store %arg4[%c0_10, %c0_11, %c0_12, %c0_13], %16 {strides = array<i32>} : memref<1x1x2x128xf32, #tpu.memory_space<vmem>>, vector<1x1x2x128xf32>,
    %cst_14 = arith.constant dense<0.000000e+00> : vector<2x128xf32>
    %17 = vector.multi_reduction <add>, %12, %cst_14 [1] : vector<2x8x128xf32> to vector<2x128xf32>
    %c0_15 = arith.constant 0 : index
    %c0_16 = arith.constant 0 : index
    %c0_17 = arith.constant 0 : index
    %c0_18 = arith.constant 0 : index
    %18 = vector.load %arg5[%c0_15, %c0_16, %c0_17, %c0_18] : memref<1x1x2x128xf32, #tpu.memory_space<vmem>>, vector<1x1x2x128xf32>
    %19 = vector.shape_cast %18 : vector<1x1x2x128xf32> to vector<2x128xf32>
    %20 = vector.shape_cast %17 : vector<2x128xf32> to vector<1x1x2x128xf32>
    tpu.vector_store %arg5[%c0_15, %c0_16, %c0_17, %c0_18], %20 {strides = array<i32>} : memref<1x1x2x128xf32, #tpu.memory_space<vmem>>, vector<1x1x2x128xf32>,
    %cst_19 = arith.constant dense<0.000000e+00> : vector<2x128xf32>
    %21 = vector.multi_reduction <add>, %3, %cst_19 [1] : vector<2x8x128xf32> to vector<2x128xf32>
    %c0_20 = arith.constant 0 : index
    %c0_21 = arith.constant 0 : index
    %c0_22 = arith.constant 0 : index
    %c0_23 = arith.constant 0 : index
    %22 = vector.load %arg6[%c0_20, %c0_21, %c0_22, %c0_23] : memref<1x1x2x128xf32, #tpu.memory_space<vmem>>, vector<1x1x2x128xf32>
    %23 = vector.shape_cast %22 : vector<1x1x2x128xf32> to vector<2x128xf32>
    %24 = vector.shape_cast %21 : vector<2x128xf32> to vector<1x1x2x128xf32>
    tpu.vector_store %arg6[%c0_20, %c0_21, %c0_22, %c0_23], %24 {strides = array<i32>} : memref<1x1x2x128xf32, #tpu.memory_space<vmem>>, vector<1x1x2x128xf32>,
    return
  }
  func.func @transform_0(%arg0: i32, %arg1: i32) -> (i32, i32, i32) {
    %c0_i32 = arith.constant 0 : i32
    %c0_i32_0 = arith.constant 0 : i32
    return %arg0, %arg1, %c0_i32 : i32, i32, i32
  }
  func.func @transform_1(%arg0: i32, %arg1: i32) -> (i32, i32, i32) {
    %c0_i32 = arith.constant 0 : i32
    %c0_i32_0 = arith.constant 0 : i32
    return %arg0, %arg1, %c0_i32 : i32, i32, i32
  }
  func.func @transform_2(%arg0: i32, %arg1: i32) -> (i32, i32, i32, i32) {
    %c0_i32 = arith.constant 0 : i32
    %c0_i32_0 = arith.constant 0 : i32
    %c0_i32_1 = arith.constant 0 : i32
    return %arg0, %arg1, %c0_i32, %c0_i32_0 : i32, i32, i32, i32
  }
  func.func @transform_3(%arg0: i32, %arg1: i32) -> (i32, i32, i32, i32) {
    %c0_i32 = arith.constant 0 : i32
    %c0_i32_0 = arith.constant 0 : i32
    %c0_i32_1 = arith.constant 0 : i32
    return %arg0, %arg1, %c0_i32, %c0_i32_0 : i32, i32, i32, i32
  }
  func.func @transform_4(%arg0: i32, %arg1: i32) -> (i32, i32, i32, i32) {
    %c0_i32 = arith.constant 0 : i32
    %c0_i32_0 = arith.constant 0 : i32
    %c0_i32_1 = arith.constant 0 : i32
    return %arg0, %arg1, %c0_i32, %c0_i32_0 : i32, i32, i32, i32
  }
}

</mosaic_0001>

<llo_original>
// kernel: tpu_custom_call.1
$region0: #{tpu_custom_call.1}
  #allocation0 [shape = 'u32[]', space=smem, size = 0x4, offset = 0x4, fixed_abs, tag = 'smem constant byte address 0x4 - core index']
  #allocation1 [shape = 'u32[144,128]{1,0:T(1,128)}', space=vmem, size = 0x12000, scoped, tag = 'internal scratch']
  %s0 = inlined_call_operand.hbm [shape: f32[2,8,128], index: 0, kind: input, shape index: {}]
  %s1 = inlined_call_operand.hbm [shape: f32[2,8,128], index: 1, kind: input, shape index: {}]
  %s2 = inlined_call_operand.hbm [shape: f32[1,1,2,128], index: 2, kind: output, shape index: {0}]
  %s3 = inlined_call_operand.hbm [shape: f32[1,1,2,128], index: 3, kind: output, shape index: {1}]
  %s4 = inlined_call_operand.hbm [shape: f32[1,1,2,128], index: 4, kind: output, shape index: {2}]
  %5 = xla_tuple %s2, %s3, %s4
  %s6 = sld [smem:[#allocation0]]
  $region42: #{tpu_custom_call.1} parent=0
    _
  %s8 = ssub.s32 1, %s6
  %s9 = scalar_select 0, %s8, %s6
  $region1: #{tpu_custom_call.1} parent=0
    #allocation2 [shape = 'u8[8192]{0}', space=vmem, size = 0x2000, scoped, tag = 'input window, operand 0, single buffered']
    #allocation3 [shape = 's32[1]{0}', space=sflag, size = 0x4, scoped, tag = 'scoped memory for tpu_custom_call.1']
    #allocation4 [shape = 's32[1]{0}', space=sflag, size = 0x4, scoped, tag = 'scoped memory for tpu_custom_call.1']
    #allocation5 [shape = 'u8[8192]{0}', space=vmem, size = 0x2000, scoped, tag = 'input window, operand 1, single buffered']
    #allocation6 [shape = 's32[1]{0}', space=sflag, size = 0x4, scoped, tag = 'scoped memory for tpu_custom_call.1']
    #allocation7 [shape = 'u8[1024]{0}', space=vmem, size = 0x400, scoped, tag = 'output window, operand 0, single buffered']
    #allocation8 [shape = 'u8[1024]{0}', space=vmem, size = 0x400, scoped, tag = 'output window, operand 1, single buffered']
    #allocation9 [shape = 's32[1]{0}', space=sflag, size = 0x4, scoped, tag = 'scoped memory for tpu_custom_call.1']
    #allocation10 [shape = 'u8[1024]{0}', space=vmem, size = 0x400, scoped, tag = 'output window, operand 2, single buffered']
    %10 = vsyncpa [#allocation3], 0
    %11 = vsyncpa [#allocation6], 0
    %12 = vsyncpa [#allocation4], 0
    %13 = vsyncpa [#allocation9], 0
    // Predicated region
    $region2: #{tpu_custom_call.1} parent=1 // pred_check
      _
    $region3: #{tpu_custom_call.1} parent=1 // pred_check_branch
      %15 = sbr.rel (0) target = $region5
    $region4: #{tpu_custom_call.1} parent=1 // pred_region
      %s17 = ssub.s32 256, 256
      %18 = vsyncadd [#allocation3], %s17
      %s19 = sshll.u32 [#allocation2], 4
      %s20 = int_to_ptr.vmem [resolvable:$true] %s19
      %25 = dma.hbm_to_vmem [thread:$0]  %s0, 256, %s20, [#allocation3], 128, 128, 8
    $region5: #{tpu_custom_call.1} parent=1 // pred_fallthru
      _
    // Predicated region
    $region6: #{tpu_custom_call.1} parent=1 // pred_check
      _
    $region7: #{tpu_custom_call.1} parent=1 // pred_check_branch
      %27 = sbr.rel (0) target = $region9
    $region8: #{tpu_custom_call.1} parent=1 // pred_region
      %s29 = ssub.s32 256, 256
      %30 = vsyncadd [#allocation6], %s29
      %s31 = sshll.u32 [#allocation5], 4
      %s32 = int_to_ptr.vmem [resolvable:$true] %s31
      %37 = dma.hbm_to_vmem [thread:$0]  %s1, 256, %s32, [#allocation6], 128, 128, 8
    $region9: #{tpu_custom_call.1} parent=1 // pred_fallthru
      _
    // Predicated region
    $region10: #{tpu_custom_call.1} parent=1 // pred_check
      _
    $region11: #{tpu_custom_call.1} parent=1 // pred_check_branch
      %39 = sbr.rel (0) target = $region13
    $region12: #{tpu_custom_call.1} parent=1 // pred_region
      %40 = dma.done [#allocation3], 256
    $region13: #{tpu_custom_call.1} parent=1 // pred_fallthru
      _
    // Predicated region
    $region14: #{tpu_custom_call.1} parent=1 // pred_check
      _
    $region15: #{tpu_custom_call.1} parent=1 // pred_check_branch
      %42 = sbr.rel (0) target = $region17
    $region16: #{tpu_custom_call.1} parent=1 // pred_region
      %43 = dma.done [#allocation6], 256
    $region17: #{tpu_custom_call.1} parent=1 // pred_fallthru
      _
    %v44 = vld [vmem:[#allocation2] sm:$0xff]
    %v45 = vld [vmem:[#allocation2 + $0x8] sm:$0xff]
    %v46 = vld [vmem:[#allocation5] sm:$0xff]
    %v47 = vld [vmem:[#allocation5 + $0x8] sm:$0xff]
    %v48 = vsub.f32 %v46, %v44
    %v49 = vsub.f32 %v47, %v45
    %v50 = vmul.f32 %v48, %v48
    %v51 = vmul.f32 %v49, %v49
    %vm52 = vcmp.eq.f32.partialorder %v44, 0.0
    %vm53 = vcmp.eq.f32.partialorder %v45, 0.0
    %vm54 = vcmp.gt.f32.partialorder %v44, 0.5
    %vm55 = vcmp.gt.f32.partialorder %v45, 0.5
    %v56 = vsel %vm54, 1.0, 0.0
    %v57 = vsel %vm55, 1.0, 0.0
    %v58 = vsel %vm52, %v50, 0.0
    %v59 = vsel %vm53, %v51, 0.0
    %v60 = vrot.slane %v56, 4
    %v61 = vadd.f32 %v56, %v60
    %v62 = vrot.slane %v61, 2
    %v63 = vadd.f32 %v61, %v62
    %v64 = vrot.slane %v63, 1
    %v65 = vadd.f32 %v63, %v64
    %v66 = vrot.slane %v57, 4
    %v67 = vadd.f32 %v57, %v66
    %v68 = vrot.slane %v67, 2
    %v69 = vadd.f32 %v67, %v68
    %v70 = vrot.slane %v69, 1
    %v71 = vadd.f32 %v69, %v70
    %vm74 = vcmask 1041409
    %v75 = vsel %vm74, %v71, %v65
    %77 = vst [vmem:[#allocation7] sm:$0x3] %v75
    %v78 = vrot.slane %v58, 4
    %v79 = vadd.f32 %v58, %v78
    %v80 = vrot.slane %v79, 2
    %v81 = vadd.f32 %v79, %v80
    %v82 = vrot.slane %v81, 1
    %v83 = vadd.f32 %v81, %v82
    %v84 = vrot.slane %v59, 4
    %v85 = vadd.f32 %v59, %v84
    %v86 = vrot.slane %v85, 2
    %v87 = vadd.f32 %v85, %v86
    %v88 = vrot.slane %v87, 1
    %v89 = vadd.f32 %v87, %v88
    %v92 = vsel %vm74, %v89, %v83
    %94 = vst [vmem:[#allocation8] sm:$0x3] %v92
    %v95 = vrot.slane %v50, 4
    %v96 = vadd.f32 %v50, %v95
    %v97 = vrot.slane %v96, 2
    %v98 = vadd.f32 %v96, %v97
    %v99 = vrot.slane %v98, 1
    %v100 = vadd.f32 %v98, %v99
    %v101 = vrot.slane %v51, 4
    %v102 = vadd.f32 %v51, %v101
    %v103 = vrot.slane %v102, 2
    %v104 = vadd.f32 %v102, %v103
    %v105 = vrot.slane %v104, 1
    %v106 = vadd.f32 %v104, %v105
    %v109 = vsel %vm74, %v106, %v100
    %111 = vst [vmem:[#allocation10] sm:$0x3] %v109
    // Predicated region
    $region18: #{tpu_custom_call.1} parent=1 // pred_check
      _
    $region19: #{tpu_custom_call.1} parent=1 // pred_check_branch
      %113 = sbr.rel (0) target = $region21
    $region20: #{tpu_custom_call.1} parent=1 // pred_region
      %s115 = ssub.s32 32, 32
      %116 = vsyncadd [#allocation4], %s115
      %s118 = sshll.u32 [#allocation7], 4
      %s119 = int_to_ptr.vmem [resolvable:$true] %s118
      %121 = dma.vmem_to_hbm [thread:$0]  %s119, 32, %s2, [#allocation4]
    $region21: #{tpu_custom_call.1} parent=1 // pred_fallthru
      _
    // Predicated region
    $region22: #{tpu_custom_call.1} parent=1 // pred_check
      _
    $region23: #{tpu_custom_call.1} parent=1 // pred_check_branch
      %123 = sbr.rel (0) target = $region25
    $region24: #{tpu_custom_call.1} parent=1 // pred_region
      %s125 = ssub.s32 32, 32
      %126 = vsyncadd [#allocation9], %s125
      %s128 = sshll.u32 [#allocation8], 4
      %s129 = int_to_ptr.vmem [resolvable:$true] %s128
      %131 = dma.vmem_to_hbm [thread:$0]  %s129, 32, %s3, [#allocation9]
    $region25: #{tpu_custom_call.1} parent=1 // pred_fallthru
      _
    // Predicated region
    $region26: #{tpu_custom_call.1} parent=1 // pred_check
      _
    $region27: #{tpu_custom_call.1} parent=1 // pred_check_branch
      %133 = sbr.rel (0) target = $region29
    $region28: #{tpu_custom_call.1} parent=1 // pred_region
      %s135 = ssub.s32 32, 32
      %136 = vsyncadd [#allocation9], %s135
      %s138 = sshll.u32 [#allocation10], 4
      %s139 = int_to_ptr.vmem [resolvable:$true] %s138
      %141 = dma.vmem_to_hbm [thread:$0]  %s139, 32, %s4, [#allocation9]
    $region29: #{tpu_custom_call.1} parent=1 // pred_fallthru
      _
    // Predicated region
    $region30: #{tpu_custom_call.1} parent=1 // pred_check
      _
    $region31: #{tpu_custom_call.1} parent=1 // pred_check_branch
      %143 = sbr.rel (0) target = $region33
    $region32: #{tpu_custom_call.1} parent=1 // pred_region
      %144 = dma.done [#allocation4], 32
    $region33: #{tpu_custom_call.1} parent=1 // pred_fallthru
      _
    // Predicated region
    $region34: #{tpu_custom_call.1} parent=1 // pred_check
      _
    $region35: #{tpu_custom_call.1} parent=1 // pred_check_branch
      %146 = sbr.rel (0) target = $region37
    $region36: #{tpu_custom_call.1} parent=1 // pred_region
      %147 = dma.done [#allocation9], 32
    $region37: #{tpu_custom_call.1} parent=1 // pred_fallthru
      _
    // Predicated region
    $region38: #{tpu_custom_call.1} parent=1 // pred_check
      _
    $region39: #{tpu_custom_call.1} parent=1 // pred_check_branch
      %149 = sbr.rel (0) target = $region41
    $region40: #{tpu_custom_call.1} parent=1 // pred_region
      %150 = dma.done [#allocation9], 32
    $region41: #{tpu_custom_call.1} parent=1 // pred_fallthru
      _
    %151 = vsyncpa [#allocation3], 1
    %152 = vsyncpa [#allocation6], 1
    %153 = vsyncpa [#allocation4], 1
    %154 = vsyncpa [#allocation9], 1

</llo_original>
